<compile_context>
chip_gen: v5e
topology: v5e:2x2
jax: 0.10.0
libtpu: 0.0.40
codegen_flags: <defaults>
</compile_context>

<pallas_src>
import jax
import jax.numpy as jnp
from jax.experimental import pallas as pl
from jax.experimental.pallas import tpu as pltpu


def logreg_kernel(x_ref, w_ref, b_ref, o_ref):
    # x_ref: (TB, D) streamed VMEM tile, w_ref: (1, D) resident VMEM row,
    # b_ref: (1, 1) SMEM scalar, o_ref: (TB, 1) VMEM tile.
    prod = x_ref[...].astype(jnp.float32) * w_ref[...]   # VPU: (1, D) broadcasts over (TB, D)
    z = jnp.sum(prod, axis=-1, keepdims=True)             # XLU lane reduce -> (TB, 1) f32
    z = z + b_ref[0, 0]                                    # scalar bias from SMEM
    o_ref[...] = jax.nn.sigmoid(z).astype(o_ref.dtype)     # EUP exp; stable for large |z|


def _round_up(x, m):
    return ((x + m - 1) // m) * m


def _choose_batch_tile(batch, features, itemsize):
    # Target ~6 MiB of useful x bytes per grid step (>= 2-4 MiB keeps a purely
    # memory-bound kernel at the ~85%+ HBM-roofline regime and amortizes the
    # ~0.35 us fixed per-step overhead), capped at 16384 rows so the lane-padded
    # (TB, 1) output VMEM buffer (512 B per row) stays modest when D is small.
    target_x_bytes = 6 * 1024 * 1024
    rows = target_x_bytes // max(features * itemsize, 1)
    rows = max(8, min(rows, 16 * 1024))
    rows = min(rows, max(batch, 8))        # never allocate more than the batch needs
    return _round_up(rows, 8)              # f32 sublane tiling (use 16 if streaming bf16)


def logistic_regression(x, w, b):
    """x: (B, D); w: any shape with D elements; b: scalar-like -> (B, 1) sigmoid(x @ w + b)."""
    B, D = x.shape
    w_row = jnp.asarray(w, jnp.float32).reshape(1, D)    # lane-dense, stays resident in VMEM
    b_smem = jnp.asarray(b, jnp.float32).reshape(1, 1)   # scalar, lives in SMEM

    itemsize = jnp.dtype(x.dtype).itemsize
    TB = _choose_batch_tile(B, D, itemsize)
    grid = (pl.cdiv(B, TB),)                # ragged last block handled by Pallas, no pad copy

    out = pl.pallas_call(
        logreg_kernel,
        out_shape=jax.ShapeDtypeStruct((B, 1), x.dtype),
        grid_spec=pltpu.PrefetchScalarGridSpec(
            num_scalar_prefetch=0,
            grid=grid,
            in_specs=[
                pl.BlockSpec((TB, D), lambda i: (i, 0)),              # streamed x tile
                pl.BlockSpec((1, D), lambda i: (0, 0)),               # resident weight row
                pl.BlockSpec(memory_space=pltpu.MemorySpace.SMEM),    # scalar bias
            ],
            out_specs=pl.BlockSpec((TB, 1), lambda i: (i, 0)),
        ),
        compiler_params=pltpu.CompilerParams(
            dimension_semantics=("parallel",),     # lets v7x shard the batch over 2 TCs
            vmem_limit_bytes=48 * 1024 * 1024,     # > v5e 16 MiB default, < v7x 64 MiB/TC
        ),
    )(x, w_row, b_smem)
    return out


if __name__ == "__main__":
    # Small synthetic shapes: batch=8, input_size=32 (matches nn.Linear(input_size, 1)).
    batch, input_size = 8, 32
    key = jax.random.PRNGKey(0)
    kx, kw, kb = jax.random.split(key, 3)

    x = jax.random.normal(kx, (batch, input_size), dtype=jnp.float32)
    w = jax.random.normal(kw, (input_size, 1), dtype=jnp.float32) * 0.1
    b = jax.random.normal(kb, (1, 1), dtype=jnp.float32) * 0.1

    out = logistic_regression(x, w, b)
    jax.block_until_ready(out)

    ref = jax.nn.sigmoid(x @ w + b)
    assert out.shape == (batch, 1) and out.dtype == x.dtype
    assert jnp.allclose(out, ref, atol=1e-5), "mismatch vs reference"

    # Ragged-batch check: B not a multiple of the tile -> exercises the no-pad
    # partial-block path (clipped input DMA, dropped OOB output writes).
    batch2 = 37
    x2 = jax.random.normal(jax.random.PRNGKey(1), (batch2, input_size), dtype=jnp.float32)
    out2 = logistic_regression(x2, w, b)
    jax.block_until_ready(out2)
    ref2 = jax.nn.sigmoid(x2 @ w + b)
    assert out2.shape == (batch2, 1)
    assert jnp.allclose(out2, ref2, atol=1e-5), "ragged-batch mismatch vs reference"

    print("KERNEL_OK")
</pallas_src>

<mosaic_0001>
module attributes {stable_mosaic.version = 11 : i64} {
  func.func @logreg_kernel(%arg0: i32, %arg1: memref<8x32xf32, #tpu.memory_space<vmem>>, %arg2: memref<1x32xf32, #tpu.memory_space<vmem>>, %arg3: memref<1x1xf32, #tpu.memory_space<smem>>, %arg4: memref<8x1xf32, #tpu.memory_space<vmem>>) attributes {dimension_semantics = [#tpu.dimension_semantics<parallel>], iteration_bounds = array<i64: 1>, scalar_prefetch = 0 : i64, scratch_operands = 0 : i64, tpu.core_type = #tpu.core_type<tc>, window_params = [{transform_indices = @transform_0, window_bounds = array<i64: 8, 32>}, {pipeline_mode = #tpu.pipeline_mode<synchronous>, transform_indices = @transform_1, window_bounds = array<i64: 1, 32>}, {transform_indices = @transform_2, window_bounds = array<i64: 1, 1>}, {transform_indices = @transform_3, window_bounds = array<i64: 8, 1>}]} {
    %c0 = arith.constant 0 : index
    %c0_0 = arith.constant 0 : index
    %0 = vector.load %arg1[%c0, %c0_0] : memref<8x32xf32, #tpu.memory_space<vmem>>, vector<8x32xf32>
    %c0_1 = arith.constant 0 : index
    %c0_2 = arith.constant 0 : index
    %1 = vector.load %arg2[%c0_1, %c0_2] : memref<1x32xf32, #tpu.memory_space<vmem>>, vector<1x32xf32>
    %2 = vector.broadcast %1 : vector<1x32xf32> to vector<8x32xf32>
    %3 = arith.mulf %0, %2 : vector<8x32xf32>
    %cst = arith.constant dense<0.000000e+00> : vector<8xf32>
    %4 = vector.multi_reduction <add>, %3, %cst [1] : vector<8x32xf32> to vector<8xf32>
    %5 = vector.shape_cast %4 : vector<8xf32> to vector<8x1xf32>
    %c0_3 = arith.constant 0 : index
    %c0_4 = arith.constant 0 : index
    %6 = memref.load %arg3[%c0_3, %c0_4] : memref<1x1xf32, #tpu.memory_space<smem>>
    %7 = vector.broadcast %6 : f32 to vector<8x1xf32>
    %8 = arith.addf %5, %7 : vector<8x1xf32>
    %9 = arith.negf %8 : vector<8x1xf32>
    %10 = math.exp %9 : vector<8x1xf32>
    %cst_5 = arith.constant 1.000000e+00 : f32
    %11 = vector.broadcast %cst_5 : f32 to vector<8x1xf32>
    %12 = arith.addf %11, %10 : vector<8x1xf32>
    %13 = arith.divf %11, %12 : vector<8x1xf32>
    %c0_6 = arith.constant 0 : index
    %c0_7 = arith.constant 0 : index
    %14 = vector.load %arg4[%c0_6, %c0_7] : memref<8x1xf32, #tpu.memory_space<vmem>>, vector<8x1xf32>
    tpu.vector_store %arg4[%c0_6, %c0_7], %13 {strides = array<i32>} : memref<8x1xf32, #tpu.memory_space<vmem>>, vector<8x1xf32>,
    return
  }
  func.func @transform_0(%arg0: i32) -> (i32, i32) {
    %c0_i32 = arith.constant 0 : i32
    %c0_i32_0 = arith.constant 0 : i32
    return %arg0, %c0_i32 : i32, i32
  }
  func.func @transform_1(%arg0: i32) -> (i32, i32) {
    %c0_i32 = arith.constant 0 : i32
    %c0_i32_0 = arith.constant 0 : i32
    %c0_i32_1 = arith.constant 0 : i32
    return %c0_i32, %c0_i32_0 : i32, i32
  }
  func.func @transform_2(%arg0: i32) -> (i32, i32) {
    %c0_i32 = arith.constant 0 : i32
    %c0_i32_0 = arith.constant 0 : i32
    %c0_i32_1 = arith.constant 0 : i32
    return %c0_i32, %c0_i32_0 : i32, i32
  }
  func.func @transform_3(%arg0: i32) -> (i32, i32) {
    %c0_i32 = arith.constant 0 : i32
    %c0_i32_0 = arith.constant 0 : i32
    return %arg0, %c0_i32 : i32, i32
  }
}

</mosaic_0001>

<llo_original>
// kernel: tpu_custom_call.1
$region0: #{tpu_custom_call.1}
  #allocation0 [shape = 'u32[]', space=smem, size = 0x4, offset = 0x4, fixed_abs, tag = 'smem constant byte address 0x4 - core index']
  #allocation1 [shape = 'u32[72,128]{1,0:T(1,128)}', space=vmem, size = 0x9000, scoped, tag = 'internal scratch']
  #allocation2 [shape = 'f32[1,1]{1,0:T(1,128)S(6)}', space=smem, size = 0x200, scoped, tag = 'scoped memory for tpu_custom_call.1']
  %s0 = inlined_call_operand.hbm [shape: f32[8,32], index: 0, kind: input, shape index: {}]
  %s1 = inlined_call_operand.vmem [shape: f32[1,32], index: 1, kind: input, shape index: {}]
  %s2 = inlined_call_operand.<no memory space> [shape: f32[1,1], index: 2, kind: input, shape index: {}]
  %s3 = inlined_call_operand.vmem [shape: f32[8,1], index: 3, kind: output, shape index: {}]
  %s4 = sld [smem:[#allocation0]]
  $region26: #{tpu_custom_call.1} parent=0
    _
  %s6 = ssub.s32 1, %s4
  %s7 = scalar_select 0, %s6, %s4
  %8 = sst [smem:[#allocation2]] %s2
  $region1: #{tpu_custom_call.1} parent=0
    #allocation3 [shape = 'u8[4096]{0}', space=vmem, size = 0x1000, scoped, tag = 'input window, operand 0, single buffered']
    #allocation4 [shape = 's32[1]{0}', space=sflag, size = 0x4, scoped, tag = 'scoped memory for tpu_custom_call.1']
    %9 = vsyncpa [#allocation4], 0
    // Predicated region
    $region2: #{tpu_custom_call.1} parent=1 // pred_check
      _
    $region3: #{tpu_custom_call.1} parent=1 // pred_check_branch
      %11 = sbr.rel (0) target = $region5
    $region4: #{tpu_custom_call.1} parent=1 // pred_region
      %13 = vsyncadd [#allocation4], 0
      %s15 = sshll.u32 %s0, 4
      %s16 = int_to_ptr.hbm [resolvable:$true] %s15
      %s17 = sshll.u32 [#allocation3], 4
      %s18 = int_to_ptr.vmem [resolvable:$true] %s17
      %20 = dma.hbm_to_vmem [thread:$0]  %s16, 128, %s18, [#allocation4]
    $region5: #{tpu_custom_call.1} parent=1 // pred_fallthru
      _
    // Predicated region
    $region6: #{tpu_custom_call.1} parent=1 // pred_check
      _
    $region7: #{tpu_custom_call.1} parent=1 // pred_check_branch
      %22 = sbr.rel (0) target = $region9
    $region8: #{tpu_custom_call.1} parent=1 // pred_region
      _
    $region9: #{tpu_custom_call.1} parent=1 // pred_fallthru
      _
    // Predicated region
    $region10: #{tpu_custom_call.1} parent=1 // pred_check
      _
    $region11: #{tpu_custom_call.1} parent=1 // pred_check_branch
      %24 = sbr.rel (0) target = $region13
    $region12: #{tpu_custom_call.1} parent=1 // pred_region
      _
    $region13: #{tpu_custom_call.1} parent=1 // pred_fallthru
      _
    // Predicated region
    $region14: #{tpu_custom_call.1} parent=1 // pred_check
      _
    $region15: #{tpu_custom_call.1} parent=1 // pred_check_branch
      %26 = sbr.rel (0) target = $region17
    $region16: #{tpu_custom_call.1} parent=1 // pred_region
      %28 = dma.done [#allocation4], 128
    $region17: #{tpu_custom_call.1} parent=1 // pred_fallthru
      _
    %v29 = vld [vmem:[#allocation3] sm:$0xff]
    %v30 = vld [vmem:[%s1] sm:$0x1]
    %v32 = vperm.slane %v30, 0
    %v34 = vmul.f32 %v29, %v32
    %vm35 = vcmask 261120
    %v36 = vsel %vm35, %v34, 0.0
    %37 = vadd.xlane.f32.xlu0 %v36
    %v38 = vpop.xlane.xlu0 %37
    %s39 = sld [smem:[#allocation2]]
    %v40 = vstv %s39
    %v41 = vadd.f32 %v38, %v40
    %v42 = vxor.u32 %v41, 2147483648
    %v43 = vmul.f32 %v42, 1.442695
    %v44 = vpow.pop %v43
    %v45 = vadd.f32 %v44, 1.0
    %v46 = vrcp.pop %v45
    %v47 = vmul.f32 %v45, %v46
    %v48 = vsub.f32 1.0, %v47
    %v49 = vmul.f32 %v46, %v48
    %v50 = vadd.f32 %v46, %v49
    %vm51 = vweird.f32 %v45
    %vm52 = vweird.f32 %v46
    %vm53 = vmor %vm51, %vm52
    %v54 = vsel %vm53, %v46, %v50
    %v55 = vand.u32 2147483647, %v45
    %vm56 = vcmp.eq.f32.partialorder %v55, 8.507059e+37
    %v57 = vand.u32 %v45, 2147483648
    %v58 = vor.u32 1.1754944e-38, %v57
    %v59 = vsel %vm56, %v58, %v54
    %v60 = vmul.f32 1.0, %v59
    %vm61 = vcmask 7168
    %62 = vst.msk [vmem:[%s3] sm:$0xff] %vm61, %v60
    // Predicated region
    $region18: #{tpu_custom_call.1} parent=1 // pred_check
      _
    $region19: #{tpu_custom_call.1} parent=1 // pred_check_branch
      %64 = sbr.rel (0) target = $region21
    $region20: #{tpu_custom_call.1} parent=1 // pred_region
      _
    $region21: #{tpu_custom_call.1} parent=1 // pred_fallthru
      _
    // Predicated region
    $region22: #{tpu_custom_call.1} parent=1 // pred_check
      _
    $region23: #{tpu_custom_call.1} parent=1 // pred_check_branch
      %66 = sbr.rel (0) target = $region25
    $region24: #{tpu_custom_call.1} parent=1 // pred_region
      _
    $region25: #{tpu_custom_call.1} parent=1 // pred_fallthru
      _
    %67 = vsyncpa [#allocation4], 1

</llo_original>
